<compile_context>
chip_gen: v7x
topology: tpu7x:2x2x1
jax: 0.10.0
libtpu: 0.0.40
codegen_flags: <defaults>
</compile_context>

<pallas_src>
import math

import jax
import jax.numpy as jnp
from jax.experimental import pallas as pl
from jax.experimental.pallas import tpu as pltpu

BN_EPS = 1e-5
OUT_PAD = 128  # lane-dense padded classifier width


def _fc_head_kernel(x_ref, w1_ref, b1_ref, w2_ref, b2_ref, w3_ref, b3_ref, out_ref):
    # x and weights are bf16; every dot accumulates in f32 on the MXU.
    # block 1: (Linear + folded BN) -> Dropout(identity, eval) -> Swish
    h = jnp.dot(x_ref[...], w1_ref[...], preferred_element_type=jnp.float32) + b1_ref[...]
    h = h * jax.nn.sigmoid(h)          # swish in f32 (v5e has no bf16 VPU/EUP)
    h = h.astype(jnp.bfloat16)         # halve vreg footprint + MXU-native input

    # block 2: (Linear + folded BN) -> Dropout(identity, eval) -> Swish
    h = jnp.dot(h, w2_ref[...], preferred_element_type=jnp.float32) + b2_ref[...]
    h = h * jax.nn.sigmoid(h)
    h = h.astype(jnp.bfloat16)

    # final classifier, padded to 128 lanes (columns >= n_class are zero)
    out_ref[...] = jnp.dot(h, w3_ref[...], preferred_element_type=jnp.float32) + b3_ref[...]


def _round_up(x, m):
    return ((x + m - 1) // m) * m


def prepare_params(params, weight_dtype=jnp.bfloat16):
    """One-time weight preparation (call ONCE, outside the per-step jit):
       * fold eval-mode BatchNorm into the preceding Linear,
       * pad the n_class-wide classifier to OUT_PAD lanes,
       * cast weights to bf16 (biases stay f32; they add to the f32 acc)."""
    s1 = params["g1"] * jax.lax.rsqrt(params["v1"] + BN_EPS)                 # [1, H1]
    w1f = (params["w1"] * s1).astype(weight_dtype)                           # [F, H1]
    b1f = ((params["b1"] - params["m1"]) * s1 + params["beta1"]).astype(jnp.float32)

    s2 = params["g2"] * jax.lax.rsqrt(params["v2"] + BN_EPS)                 # [1, H2]
    w2f = (params["w2"] * s2).astype(weight_dtype)                           # [H1, H2]
    b2f = ((params["b2"] - params["m2"]) * s2 + params["beta2"]).astype(jnp.float32)

    H2, n_class = params["w3"].shape
    w3p = jnp.zeros((H2, OUT_PAD), weight_dtype).at[:, :n_class].set(
        params["w3"].astype(weight_dtype))
    b3p = jnp.zeros((1, OUT_PAD), jnp.float32).at[:, :n_class].set(
        params["b3"].astype(jnp.float32))

    prepared = dict(w1=w1f, b1=b1f, w2=w2f, b2=b2f, w3=w3p, b3=b3p)
    return prepared, n_class


def cassava_fc_head(feature, prepared, *, n_class, tb=128):
    """feature: [B, n_features] float32.  Returns (feature, logits[B, n_class])."""
    B, F = feature.shape
    H1 = prepared["w1"].shape[1]
    H2 = prepared["w2"].shape[1]

    # ---- batch tiling: row tiles over the grid, weights VMEM-resident ----
    TB = min(tb, _round_up(B, 16))          # 16-row granularity (bf16 sublane tile)
    B_pad = _round_up(B, TB)
    x = feature.astype(jnp.bfloat16)
    if B_pad != B:
        x = jnp.pad(x, ((0, B_pad - B), (0, 0)))
    num_tiles = B_pad // TB

    in_specs = [
        pl.BlockSpec((TB, F), lambda i: (i, 0)),        # feature rows (tiled)
        pl.BlockSpec((F, H1), lambda i: (0, 0)),        # folded W1 (bf16)
        pl.BlockSpec((1, H1), lambda i: (0, 0)),        # folded b1 (f32)
        pl.BlockSpec((H1, H2), lambda i: (0, 0)),       # folded W2 (bf16)
        pl.BlockSpec((1, H2), lambda i: (0, 0)),        # folded b2 (f32)
        pl.BlockSpec((H2, OUT_PAD), lambda i: (0, 0)),  # padded W3 (bf16)
        pl.BlockSpec((1, OUT_PAD), lambda i: (0, 0)),   # padded b3 (f32)
    ]
    out_specs = pl.BlockSpec((TB, OUT_PAD), lambda i: (i, 0))

    # Only shard the row-tile axis across cores when there are enough tiles to
    # hide the duplicated weight fetch (v7x has 2 TCs; weights get DMA'd twice).
    sem = ("parallel",) if num_tiles >= 4 else ("arbitrary",)

    out_padded = pl.pallas_call(
        _fc_head_kernel,
        out_shape=jax.ShapeDtypeStruct((B_pad, OUT_PAD), jnp.float32),
        grid=(num_tiles,),
        in_specs=in_specs,
        out_specs=out_specs,
        compiler_params=pltpu.CompilerParams(dimension_semantics=sem),
    )(x, prepared["w1"], prepared["b1"], prepared["w2"], prepared["b2"],
      prepared["w3"], prepared["b3"])

    return feature, out_padded[:B, :n_class]


def _linear_init(key, fan_in, fan_out):
    """PyTorch nn.Linear default init, weight stored in [in, out] layout."""
    kw, kb = jax.random.split(key)
    bound = 1.0 / math.sqrt(fan_in)
    w = jax.random.uniform(kw, (fan_in, fan_out), jnp.float32, -bound, bound)
    b = jax.random.uniform(kb, (1, fan_out), jnp.float32, -bound, bound)
    return w, b


def make_params(key, n_features=256, h1=512, h2=256, n_class=5):
    k1, k2, k3, k4, k5 = jax.random.split(key, 5)
    w1, b1 = _linear_init(k1, n_features, h1)
    w2, b2 = _linear_init(k2, h1, h2)
    w3, b3 = _linear_init(k3, h2, n_class)
    # Non-trivial BN stats so the BN-folding path is actually exercised.
    kg1, kb1, km1, kv1 = jax.random.split(k4, 4)
    kg2, kb2, km2, kv2 = jax.random.split(k5, 4)
    return dict(
        w1=w1, b1=b1,
        g1=jax.random.uniform(kg1, (1, h1), jnp.float32, 0.5, 1.5),
        beta1=jax.random.normal(kb1, (1, h1), jnp.float32) * 0.1,
        m1=jax.random.normal(km1, (1, h1), jnp.float32) * 0.1,
        v1=jax.random.uniform(kv1, (1, h1), jnp.float32, 0.5, 1.5),
        w2=w2, b2=b2,
        g2=jax.random.uniform(kg2, (1, h2), jnp.float32, 0.5, 1.5),
        beta2=jax.random.normal(kb2, (1, h2), jnp.float32) * 0.1,
        m2=jax.random.normal(km2, (1, h2), jnp.float32) * 0.1,
        v2=jax.random.uniform(kv2, (1, h2), jnp.float32, 0.5, 1.5),
        w3=w3, b3=b3,
    )


def _reference(feature, p):
    """Pure-JAX f32 reference of the fc head (eval mode, un-folded BN)."""
    def bn(x, g, b, m, v):
        return (x - m) * jax.lax.rsqrt(v + BN_EPS) * g + b

    h = feature @ p["w1"] + p["b1"]
    h = bn(h, p["g1"], p["beta1"], p["m1"], p["v1"])
    h = h * jax.nn.sigmoid(h)
    h = h @ p["w2"] + p["b2"]
    h = bn(h, p["g2"], p["beta2"], p["m2"], p["v2"])
    h = h * jax.nn.sigmoid(h)
    return h @ p["w3"] + p["b3"]


if __name__ == "__main__":
    key = jax.random.PRNGKey(0)
    k_x, k_p = jax.random.split(key)

    B, n_features = 8, 256  # small backbone-feature shape consistent with the module
    feature_in = jax.random.normal(k_x, (B, n_features), jnp.float32)
    params = make_params(k_p, n_features=n_features)

    # One-time weight preparation (outside the per-call jitted path).
    prepared, n_class = prepare_params(params)
    prepared = jax.block_until_ready(prepared)

    head_fn = jax.jit(cassava_fc_head, static_argnames=("n_class", "tb"))
    feature, logits = head_fn(feature_in, prepared, n_class=n_class)
    jax.block_until_ready((feature, logits))

    ref = _reference(feature_in, params)
    assert logits.shape == (B, n_class), logits.shape
    # bf16 weights/activations -> looser tolerance than the f32 version.
    assert jnp.allclose(logits, ref, atol=3e-2, rtol=3e-2), (
        "mismatch vs. JAX reference; max abs diff = "
        f"{float(jnp.max(jnp.abs(logits - ref)))}")
    assert jnp.array_equal(feature, feature_in)

    print("KERNEL_OK")
</pallas_src>

<mosaic_0001>
module attributes {stable_mosaic.version = 11 : i64} {
  func.func @_fc_head_kernel(%arg0: i32, %arg1: memref<16x256xbf16, #tpu.memory_space<vmem>>, %arg2: memref<256x512xbf16, #tpu.memory_space<vmem>>, %arg3: memref<1x512xf32, #tpu.memory_space<vmem>>, %arg4: memref<512x256xbf16, #tpu.memory_space<vmem>>, %arg5: memref<1x256xf32, #tpu.memory_space<vmem>>, %arg6: memref<256x128xbf16, #tpu.memory_space<vmem>>, %arg7: memref<1x128xf32, #tpu.memory_space<vmem>>, %arg8: memref<16x128xf32, #tpu.memory_space<vmem>>) attributes {dimension_semantics = [#tpu.dimension_semantics<arbitrary>], iteration_bounds = array<i64: 1>, scalar_prefetch = 0 : i64, scratch_operands = 0 : i64, tpu.core_type = #tpu.core_type<tc>, window_params = [{transform_indices = @transform_0, window_bounds = array<i64: 16, 256>}, {pipeline_mode = #tpu.pipeline_mode<synchronous>, transform_indices = @transform_1, window_bounds = array<i64: 256, 512>}, {pipeline_mode = #tpu.pipeline_mode<synchronous>, transform_indices = @transform_2, window_bounds = array<i64: 1, 512>}, {pipeline_mode = #tpu.pipeline_mode<synchronous>, transform_indices = @transform_3, window_bounds = array<i64: 512, 256>}, {pipeline_mode = #tpu.pipeline_mode<synchronous>, transform_indices = @transform_4, window_bounds = array<i64: 1, 256>}, {pipeline_mode = #tpu.pipeline_mode<synchronous>, transform_indices = @transform_5, window_bounds = array<i64: 256, 128>}, {pipeline_mode = #tpu.pipeline_mode<synchronous>, transform_indices = @transform_6, window_bounds = array<i64: 1, 128>}, {transform_indices = @transform_7, window_bounds = array<i64: 16, 128>}]} {
    %c0 = arith.constant 0 : index
    %c0_0 = arith.constant 0 : index
    %0 = vector.load %arg1[%c0, %c0_0] : memref<16x256xbf16, #tpu.memory_space<vmem>>, vector<16x256xbf16>
    %c0_1 = arith.constant 0 : index
    %c0_2 = arith.constant 0 : index
    %1 = vector.load %arg2[%c0_1, %c0_2] : memref<256x512xbf16, #tpu.memory_space<vmem>>, vector<256x512xbf16>
    %cst = arith.constant dense<0.000000e+00> : vector<16x512xf32>
    %2 = tpu.matmul %0, %1, %cst {dimension_numbers = #tpu.dot_dimension_numbers<[1], [0], [0], [1], [0, 0, 1, 1], [], []>} : vector<16x256xbf16>, vector<256x512xbf16>, vector<16x512xf32> -> vector<16x512xf32>
    %c0_3 = arith.constant 0 : index
    %c0_4 = arith.constant 0 : index
    %3 = vector.load %arg3[%c0_3, %c0_4] : memref<1x512xf32, #tpu.memory_space<vmem>>, vector<1x512xf32>
    %4 = vector.broadcast %3 : vector<1x512xf32> to vector<16x512xf32>
    %5 = arith.addf %2, %4 : vector<16x512xf32>
    %6 = arith.negf %5 : vector<16x512xf32>
    %7 = math.exp %6 : vector<16x512xf32>
    %cst_5 = arith.constant 1.000000e+00 : f32
    %8 = vector.broadcast %cst_5 : f32 to vector<16x512xf32>
    %9 = arith.addf %8, %7 : vector<16x512xf32>
    %10 = arith.divf %8, %9 : vector<16x512xf32>
    %11 = arith.mulf %5, %10 : vector<16x512xf32>
    %12 = arith.truncf %11 : vector<16x512xf32> to vector<16x512xbf16>
    %c0_6 = arith.constant 0 : index
    %c0_7 = arith.constant 0 : index
    %13 = vector.load %arg4[%c0_6, %c0_7] : memref<512x256xbf16, #tpu.memory_space<vmem>>, vector<512x256xbf16>
    %cst_8 = arith.constant dense<0.000000e+00> : vector<16x256xf32>
    %14 = tpu.matmul %12, %13, %cst_8 {dimension_numbers = #tpu.dot_dimension_numbers<[1], [0], [0], [1], [0, 0, 1, 1], [], []>} : vector<16x512xbf16>, vector<512x256xbf16>, vector<16x256xf32> -> vector<16x256xf32>
    %c0_9 = arith.constant 0 : index
    %c0_10 = arith.constant 0 : index
    %15 = vector.load %arg5[%c0_9, %c0_10] : memref<1x256xf32, #tpu.memory_space<vmem>>, vector<1x256xf32>
    %16 = vector.broadcast %15 : vector<1x256xf32> to vector<16x256xf32>
    %17 = arith.addf %14, %16 : vector<16x256xf32>
    %18 = arith.negf %17 : vector<16x256xf32>
    %19 = math.exp %18 : vector<16x256xf32>
    %cst_11 = arith.constant 1.000000e+00 : f32
    %20 = vector.broadcast %cst_11 : f32 to vector<16x256xf32>
    %21 = arith.addf %20, %19 : vector<16x256xf32>
    %22 = arith.divf %20, %21 : vector<16x256xf32>
    %23 = arith.mulf %17, %22 : vector<16x256xf32>
    %24 = arith.truncf %23 : vector<16x256xf32> to vector<16x256xbf16>
    %c0_12 = arith.constant 0 : index
    %c0_13 = arith.constant 0 : index
    %25 = vector.load %arg6[%c0_12, %c0_13] : memref<256x128xbf16, #tpu.memory_space<vmem>>, vector<256x128xbf16>
    %cst_14 = arith.constant dense<0.000000e+00> : vector<16x128xf32>
    %26 = tpu.matmul %24, %25, %cst_14 {dimension_numbers = #tpu.dot_dimension_numbers<[1], [0], [0], [1], [0, 0, 1, 1], [], []>} : vector<16x256xbf16>, vector<256x128xbf16>, vector<16x128xf32> -> vector<16x128xf32>
    %c0_15 = arith.constant 0 : index
    %c0_16 = arith.constant 0 : index
    %27 = vector.load %arg7[%c0_15, %c0_16] : memref<1x128xf32, #tpu.memory_space<vmem>>, vector<1x128xf32>
    %28 = vector.broadcast %27 : vector<1x128xf32> to vector<16x128xf32>
    %29 = arith.addf %26, %28 : vector<16x128xf32>
    %c0_17 = arith.constant 0 : index
    %c0_18 = arith.constant 0 : index
    %30 = vector.load %arg8[%c0_17, %c0_18] : memref<16x128xf32, #tpu.memory_space<vmem>>, vector<16x128xf32>
    tpu.vector_store %arg8[%c0_17, %c0_18], %29 {strides = array<i32>} : memref<16x128xf32, #tpu.memory_space<vmem>>, vector<16x128xf32>,
    return
  }
  func.func @transform_0(%arg0: i32) -> (i32, i32) {
    %c0_i32 = arith.constant 0 : i32
    %c0_i32_0 = arith.constant 0 : i32
    return %arg0, %c0_i32 : i32, i32
  }
  func.func @transform_1(%arg0: i32) -> (i32, i32) {
    %c0_i32 = arith.constant 0 : i32
    %c0_i32_0 = arith.constant 0 : i32
    %c0_i32_1 = arith.constant 0 : i32
    return %c0_i32, %c0_i32_0 : i32, i32
  }
  func.func @transform_2(%arg0: i32) -> (i32, i32) {
    %c0_i32 = arith.constant 0 : i32
    %c0_i32_0 = arith.constant 0 : i32
    %c0_i32_1 = arith.constant 0 : i32
    return %c0_i32, %c0_i32_0 : i32, i32
  }
  func.func @transform_3(%arg0: i32) -> (i32, i32) {
    %c0_i32 = arith.constant 0 : i32
    %c0_i32_0 = arith.constant 0 : i32
    %c0_i32_1 = arith.constant 0 : i32
    return %c0_i32, %c0_i32_0 : i32, i32
  }
  func.func @transform_4(%arg0: i32) -> (i32, i32) {
    %c0_i32 = arith.constant 0 : i32
    %c0_i32_0 = arith.constant 0 : i32
    %c0_i32_1 = arith.constant 0 : i32
    return %c0_i32, %c0_i32_0 : i32, i32
  }
  func.func @transform_5(%arg0: i32) -> (i32, i32) {
    %c0_i32 = arith.constant 0 : i32
    %c0_i32_0 = arith.constant 0 : i32
    %c0_i32_1 = arith.constant 0 : i32
    return %c0_i32, %c0_i32_0 : i32, i32
  }
  func.func @transform_6(%arg0: i32) -> (i32, i32) {
    %c0_i32 = arith.constant 0 : i32
    %c0_i32_0 = arith.constant 0 : i32
    %c0_i32_1 = arith.constant 0 : i32
    return %c0_i32, %c0_i32_0 : i32, i32
  }
  func.func @transform_7(%arg0: i32) -> (i32, i32) {
    %c0_i32 = arith.constant 0 : i32
    %c0_i32_0 = arith.constant 0 : i32
    return %arg0, %c0_i32 : i32, i32
  }
}

</mosaic_0001>

<llo_original>
// kernel: cassava_fc_head.1
$region0: #{cassava_fc_head.1}
  #allocation0 [shape = 'u32[]', space=smem, size = 0x4, offset = 0x4, fixed_abs, tag = 'smem constant byte address 0x4 - core index']
  #allocation1 [shape = 'u32[144,128]{1,0:T(1,128)}', space=vmem, size = 0x12000, scoped, tag = 'internal scratch']
  %s0 = inlined_call_operand.vmem [shape: bf16[16,256], index: 0, kind: input, shape index: {}]
  %s1 = inlined_call_operand.hbm [shape: bf16[256,512], index: 1, kind: input, shape index: {}]
  %s2 = inlined_call_operand.vmem [shape: f32[1,512], index: 2, kind: input, shape index: {}]
  %s3 = inlined_call_operand.hbm [shape: bf16[512,256], index: 3, kind: input, shape index: {}]
  %s4 = inlined_call_operand.vmem [shape: f32[1,256], index: 4, kind: input, shape index: {}]
  %s5 = inlined_call_operand.hbm [shape: bf16[256,128], index: 5, kind: input, shape index: {}]
  %s6 = inlined_call_operand.vmem [shape: f32[1,128], index: 6, kind: input, shape index: {}]
  %s7 = inlined_call_operand.vmem [shape: f32[16,128], index: 7, kind: output, shape index: {}]
  %s8 = sld [smem:[#allocation0]]
  $region50: #{cassava_fc_head.1} parent=0
    _
  %s10 = ssub.s32 1, %s8
  %s11 = scalar_select 0, %s10, %s8
  $region1: #{cassava_fc_head.1} parent=0
    #allocation2 [shape = 'u8[262144]{0}', space=vmem, size = 0x40000, scoped, tag = 'input window, operand 1, single buffered']
    #allocation3 [shape = 's32[1]{0}', space=sflag, size = 0x4, scoped, tag = 'scoped memory for cassava_fc_head.1']
    #allocation4 [shape = 'u8[262144]{0}', space=vmem, size = 0x40000, scoped, tag = 'input window, operand 3, single buffered']
    #allocation5 [shape = 's32[1]{0}', space=sflag, size = 0x4, scoped, tag = 'scoped memory for cassava_fc_head.1']
    #allocation6 [shape = 'u8[65536]{0}', space=vmem, size = 0x10000, scoped, tag = 'input window, operand 5, single buffered']
    %12 = vsyncpa [#allocation3], 0
    %13 = vsyncpa [#allocation5], 0
    // Predicated region
    $region2: #{cassava_fc_head.1} parent=1 // pred_check
      _
    $region3: #{cassava_fc_head.1} parent=1 // pred_check_branch
      %15 = sbr.rel (0) target = $region5
    $region4: #{cassava_fc_head.1} parent=1 // pred_region
      _
    $region5: #{cassava_fc_head.1} parent=1 // pred_fallthru
      _
    // Predicated region
    $region6: #{cassava_fc_head.1} parent=1 // pred_check
      _
    $region7: #{cassava_fc_head.1} parent=1 // pred_check_branch
      %17 = sbr.rel (0) target = $region9
    $region8: #{cassava_fc_head.1} parent=1 // pred_region
      %s19 = ssub.s32 8192, 8192
      %20 = vsyncadd [#allocation3], %s19
      %s21 = sshll.u32 [#allocation2], 4
      %s22 = int_to_ptr.vmem [resolvable:$true] %s21
      %27 = dma.hbm_to_vmem [thread:$0]  %s1, 8192, %s22, [#allocation3], 256, 256, 16
    $region9: #{cassava_fc_head.1} parent=1 // pred_fallthru
      _
    // Predicated region
    $region10: #{cassava_fc_head.1} parent=1 // pred_check
      _
    $region11: #{cassava_fc_head.1} parent=1 // pred_check_branch
      %29 = sbr.rel (0) target = $region13
    $region12: #{cassava_fc_head.1} parent=1 // pred_region
      _
    $region13: #{cassava_fc_head.1} parent=1 // pred_fallthru
      _
    // Predicated region
    $region14: #{cassava_fc_head.1} parent=1 // pred_check
      _
    $region15: #{cassava_fc_head.1} parent=1 // pred_check_branch
      %31 = sbr.rel (0) target = $region17
    $region16: #{cassava_fc_head.1} parent=1 // pred_region
      %s33 = ssub.s32 8192, 8192
      %34 = vsyncadd [#allocation5], %s33
      %s35 = sshll.u32 [#allocation4], 4
      %s36 = int_to_ptr.vmem [resolvable:$true] %s35
      %41 = dma.hbm_to_vmem [thread:$0]  %s3, 8192, %s36, [#allocation5], 128, 128, 8
    $region17: #{cassava_fc_head.1} parent=1 // pred_fallthru
      _
    // Predicated region
    $region18: #{cassava_fc_head.1} parent=1 // pred_check
      _
    $region19: #{cassava_fc_head.1} parent=1 // pred_check_branch
      %43 = sbr.rel (0) target = $region21
    $region20: #{cassava_fc_head.1} parent=1 // pred_region
      _
    $region21: #{cassava_fc_head.1} parent=1 // pred_fallthru
      _
    // Predicated region
    $region22: #{cassava_fc_head.1} parent=1 // pred_check
      _
    $region23: #{cassava_fc_head.1} parent=1 // pred_check_branch
      %45 = sbr.rel (0) target = $region25
    $region24: #{cassava_fc_head.1} parent=1 // pred_region
      %s47 = ssub.s32 2048, 2048
      %48 = vsyncadd [#allocation5], %s47
      %s49 = sshll.u32 [#allocation6], 4
      %s50 = int_to_ptr.vmem [resolvable:$true] %s49
      %55 = dma.hbm_to_vmem [thread:$0]  %s5, 2048, %s50, [#allocation5], 64, 64, 4
    $region25: #{cassava_fc_head.1} parent=1 // pred_fallthru
      _
    // Predicated region
    $region26: #{cassava_fc_head.1} parent=1 // pred_check
      _
    $region27: #{cassava_fc_head.1} parent=1 // pred_check_branch
      %57 = sbr.rel (0) target = $region29
    $region28: #{cassava_fc_head.1} parent=1 // pred_region
      _
    $region29: #{cassava_fc_head.1} parent=1 // pred_fallthru
      _
    // Predicated region
    $region30: #{cassava_fc_head.1} parent=1 // pred_check
      _
    $region31: #{cassava_fc_head.1} parent=1 // pred_check_branch
      %59 = sbr.rel (0) target = $region33
    $region32: #{cassava_fc_head.1} parent=1 // pred_region
      %60 = dma.done [#allocation3], 8192
    $region33: #{cassava_fc_head.1} parent=1 // pred_fallthru
      _
    // Predicated region
    $region34: #{cassava_fc_head.1} parent=1 // pred_check
      _
    $region35: #{cassava_fc_head.1} parent=1 // pred_check_branch
      %62 = sbr.rel (0) target = $region37
    $region36: #{cassava_fc_head.1} parent=1 // pred_region
      %63 = dma.done [#allocation5], 8192
    $region37: #{cassava_fc_head.1} parent=1 // pred_fallthru
      _
    // Predicated region
    $region38: #{cassava_fc_head.1} parent=1 // pred_check
      _
    $region39: #{cassava_fc_head.1} parent=1 // pred_check_branch
      %65 = sbr.rel (0) target = $region41
    $region40: #{cassava_fc_head.1} parent=1 // pred_region
      %66 = dma.done [#allocation5], 2048
    $region41: #{cassava_fc_head.1} parent=1 // pred_fallthru
      _
    %v68 = vld [vmem:[%s0] sm:$0xff]
    %v69 = vld [vmem:[%s0 + $0x8] sm:$0xff]
    %v70 = vld [vmem:[#allocation2] sm:$0xff]
    %v71 = vld [vmem:[#allocation2 + $0x8] sm:$0xff]
    %v72 = vld [vmem:[#allocation2 + $0x10] sm:$0xff]
    %v73 = vld [vmem:[#allocation2 + $0x18] sm:$0xff]
    %v74 = vld [vmem:[#allocation2 + $0x20] sm:$0xff]
    %v75 = vld [vmem:[#allocation2 + $0x28] sm:$0xff]
    %v76 = vld [vmem:[#allocation2 + $0x30] sm:$0xff]
    %v77 = vld [vmem:[#allocation2 + $0x38] sm:$0xff]
    %v78 = vld [vmem:[#allocation2 + $0x40] sm:$0xff]
    %v79 = vld [vmem:[#allocation2 + $0x48] sm:$0xff]
    %v80 = vld [vmem:[#allocation2 + $0x50] sm:$0xff]
    %v81 = vld [vmem:[#allocation2 + $0x58] sm:$0xff]
    %v82 = vld [vmem:[#allocation2 + $0x60] sm:$0xff]
    %v83 = vld [vmem:[#allocation2 + $0x68] sm:$0xff]
    %v84 = vld [vmem:[#allocation2 + $0x70] sm:$0xff]
    %v85 = vld [vmem:[#allocation2 + $0x78] sm:$0xff]
    %v86 = vld [vmem:[#allocation2 + $0x80] sm:$0xff]
    %v87 = vld [vmem:[#allocation2 + $0x88] sm:$0xff]
    %v88 = vld [vmem:[#allocation2 + $0x90] sm:$0xff]
    %v89 = vld [vmem:[#allocation2 + $0x98] sm:$0xff]
    %v90 = vld [vmem:[#allocation2 + $0xa0] sm:$0xff]
    %v91 = vld [vmem:[#allocation2 + $0xa8] sm:$0xff]
    %v92 = vld [vmem:[#allocation2 + $0xb0] sm:$0xff]
    %v93 = vld [vmem:[#allocation2 + $0xb8] sm:$0xff]
    %v94 = vld [vmem:[#allocation2 + $0xc0] sm:$0xff]
    %v95 = vld [vmem:[#allocation2 + $0xc8] sm:$0xff]
    %v96 = vld [vmem:[#allocation2 + $0xd0] sm:$0xff]
    %v97 = vld [vmem:[#allocation2 + $0xd8] sm:$0xff]
    %v98 = vld [vmem:[#allocation2 + $0xe0] sm:$0xff]
    %v99 = vld [vmem:[#allocation2 + $0xe8] sm:$0xff]
    %v100 = vld [vmem:[#allocation2 + $0xf0] sm:$0xff]
    %v101 = vld [vmem:[#allocation2 + $0xf8] sm:$0xff]
    %v102 = vld [vmem:[#allocation2 + $0x100] sm:$0xff]
    %v103 = vld [vmem:[#allocation2 + $0x108] sm:$0xff]
    %v104 = vld [vmem:[#allocation2 + $0x110] sm:$0xff]
    %v105 = vld [vmem:[#allocation2 + $0x118] sm:$0xff]
    %v106 = vld [vmem:[#allocation2 + $0x120] sm:$0xff]
    %v107 = vld [vmem:[#allocation2 + $0x128] sm:$0xff]
    %v108 = vld [vmem:[#allocation2 + $0x130] sm:$0xff]
    %v109 = vld [vmem:[#allocation2 + $0x138] sm:$0xff]
    %v110 = vld [vmem:[#allocation2 + $0x140] sm:$0xff]
    %v111 = vld [vmem:[#allocation2 + $0x148] sm:$0xff]
    %v112 = vld [vmem:[#allocation2 + $0x150] sm:$0xff]
    %v113 = vld [vmem:[#allocation2 + $0x158] sm:$0xff]
    %v114 = vld [vmem:[#allocation2 + $0x160] sm:$0xff]
    %v115 = vld [vmem:[#allocation2 + $0x168] sm:$0xff]
    %v116 = vld [vmem:[#allocation2 + $0x170] sm:$0xff]
    %v117 = vld [vmem:[#allocation2 + $0x178] sm:$0xff]
    %v118 = vld [vmem:[#allocation2 + $0x180] sm:$0xff]
    %v119 = vld [vmem:[#allocation2 + $0x188] sm:$0xff]
    %v120 = vld [vmem:[#allocation2 + $0x190] sm:$0xff]
    %v121 = vld [vmem:[#allocation2 + $0x198] sm:$0xff]
    %v122 = vld [vmem:[#allocation2 + $0x1a0] sm:$0xff]
    %v123 = vld [vmem:[#allocation2 + $0x1a8] sm:$0xff]
    %v124 = vld [vmem:[#allocation2 + $0x1b0] sm:$0xff]
    %v125 = vld [vmem:[#allocation2 + $0x1b8] sm:$0xff]
    %v126 = vld [vmem:[#allocation2 + $0x1c0] sm:$0xff]
    %v127 = vld [vmem:[#allocation2 + $0x1c8] sm:$0xff]
    %v128 = vld [vmem:[#allocation2 + $0x1d0] sm:$0xff]
    %v129 = vld [vmem:[#allocation2 + $0x1d8] sm:$0xff]
    %v130 = vld [vmem:[#allocation2 + $0x1e0] sm:$0xff]
    %v131 = vld [vmem:[#allocation2 + $0x1e8] sm:$0xff]
    %v132 = vld [vmem:[#allocation2 + $0x1f0] sm:$0xff]
    %v133 = vld [vmem:[#allocation2 + $0x1f8] sm:$0xff]
    %v134 = vld [vmem:[%s2] sm:$0xf]
    %v136 = vlaneseq
    %v137 = vshrl.u32 %v136, 7
    %v138 = vsub.s32 0, %v137
    %v139 = vrot.slane %v134, %v138
    %v140 = vlaneseq
    %v141 = vshrl.u32 %v140, 7
    %v142 = vsub.s32 1, %v141
    %v143 = vrot.slane %v134, %v142
    %v144 = vlaneseq
    %v145 = vshrl.u32 %v144, 7
    %v146 = vsub.s32 2, %v145
    %v147 = vrot.slane %v134, %v146
    %v148 = vlaneseq
    %v149 = vshrl.u32 %v148, 7
    %v150 = vsub.s32 3, %v149
    %v151 = vrot.slane %v134, %v150
    %v158 = vunpack.c.l.b16 %v68
    %v159 = vunpack.c.h.b16 %v68
    %v160 = vunpack.c.l.b16 %v69
    %v161 = vunpack.c.h.b16 %v69
    %v162 = vpack.c.b16 %v160, %v158
    %v163 = vpack.c.b16 %v161, %v159
    %v230 = vunpack.c.l.b16 %v70
    %v231 = vunpack.c.h.b16 %v70
    %v232 = vunpack.c.l.b16 %v71
    %v233 = vunpack.c.h.b16 %v71
    %v234 = vunpack.c.l.b16 %v72
    %v235 = vunpack.c.h.b16 %v72
    %v236 = vunpack.c.l.b16 %v73
    %v237 = vunpack.c.h.b16 %v73
    %v238 = vunpack.c.l.b16 %v74
    %v239 = vunpack.c.h.b16 %v74
    %v240 = vunpack.c.l.b16 %v75
    %v241 = vunpack.c.h.b16 %v75
    %v242 = vunpack.c.l.b16 %v76
    %v243 = vunpack.c.h.b16 %v76
    %v244 = vunpack.c.l.b16 %v77
    %v245 = vunpack.c.h.b16 %v77
    %v246 = vunpack.c.l.b16 %v78
    %v247 = vunpack.c.h.b16 %v78
    %v248 = vunpack.c.l.b16 %v79
    %v249 = vunpack.c.h.b16 %v79
    %v250 = vunpack.c.l.b16 %v80
    %v251 = vunpack.c.h.b16 %v80
    %v252 = vunpack.c.l.b16 %v81
    %v253 = vunpack.c.h.b16 %v81
    %v254 = vunpack.c.l.b16 %v82
    %v255 = vunpack.c.h.b16 %v82
    %v256 = vunpack.c.l.b16 %v83
    %v257 = vunpack.c.h.b16 %v83
    %v258 = vunpack.c.l.b16 %v84
    %v259 = vunpack.c.h.b16 %v84
    %v260 = vunpack.c.l.b16 %v85
    %v261 = vunpack.c.h.b16 %v85
    %v262 = vunpack.c.l.b16 %v86
    %v263 = vunpack.c.h.b16 %v86
    %v264 = vunpack.c.l.b16 %v87
    %v265 = vunpack.c.h.b16 %v87
    %v266 = vunpack.c.l.b16 %v88
    %v267 = vunpack.c.h.b16 %v88
    %v268 = vunpack.c.l.b16 %v89
    %v269 = vunpack.c.h.b16 %v89
    %v270 = vunpack.c.l.b16 %v90
    %v271 = vunpack.c.h.b16 %v90
    %v272 = vunpack.c.l.b16 %v91
    %v273 = vunpack.c.h.b16 %v91
    %v274 = vunpack.c.l.b16 %v92
    %v275 = vunpack.c.h.b16 %v92
    %v276 = vunpack.c.l.b16 %v93
    %v277 = vunpack.c.h.b16 %v93
    %v278 = vunpack.c.l.b16 %v94
    %v279 = vunpack.c.h.b16 %v94
    %v280 = vunpack.c.l.b16 %v95
    %v281 = vunpack.c.h.b16 %v95
    %v282 = vunpack.c.l.b16 %v96
    %v283 = vunpack.c.h.b16 %v96
    %v284 = vunpack.c.l.b16 %v97
    %v285 = vunpack.c.h.b16 %v97
    %v286 = vunpack.c.l.b16 %v98
    %v287 = vunpack.c.h.b16 %v98
    %v288 = vunpack.c.l.b16 %v99
    %v289 = vunpack.c.h.b16 %v99
    %v290 = vunpack.c.l.b16 %v100
    %v291 = vunpack.c.h.b16 %v100
    %v292 = vunpack.c.l.b16 %v101
    %v293 = vunpack.c.h.b16 %v101
    %v294 = vunpack.c.l.b16 %v102
    %v295 = vunpack.c.h.b16 %v102
    %v296 = vunpack.c.l.b16 %v103
    %v297 = vunpack.c.h.b16 %v103
    %v298 = vunpack.c.l.b16 %v104
    %v299 = vunpack.c.h.b16 %v104
    %v300 = vunpack.c.l.b16 %v105
    %v301 = vunpack.c.h.b16 %v105
    %v302 = vunpack.c.l.b16 %v106
    %v303 = vunpack.c.h.b16 %v106
    %v304 = vunpack.c.l.b16 %v107
    %v305 = vunpack.c.h.b16 %v107
    %v306 = vunpack.c.l.b16 %v108
    %v307 = vunpack.c.h.b16 %v108
    %v308 = vunpack.c.l.b16 %v109
    %v309 = vunpack.c.h.b16 %v109
    %v310 = vunpack.c.l.b16 %v110
    %v311 = vunpack.c.h.b16 %v110
    %v312 = vunpack.c.l.b16 %v111
    %v313 = vunpack.c.h.b16 %v111
    %v314 = vunpack.c.l.b16 %v112
    %v315 = vunpack.c.h.b16 %v112
    %v316 = vunpack.c.l.b16 %v113
    %v317 = vunpack.c.h.b16 %v113
    %v318 = vunpack.c.l.b16 %v114
    %v319 = vunpack.c.h.b16 %v114
    %v320 = vunpack.c.l.b16 %v115
    %v321 = vunpack.c.h.b16 %v115
    %v322 = vunpack.c.l.b16 %v116
    %v323 = vunpack.c.h.b16 %v116
    %v324 = vunpack.c.l.b16 %v117
    %v325 = vunpack.c.h.b16 %v117
    %v326 = vunpack.c.l.b16 %v118
    %v327 = vunpack.c.h.b16 %v118
    %v328 = vunpack.c.l.b16 %v119
    %v329 = vunpack.c.h.b16 %v119
    %v330 = vunpack.c.l.b16 %v120
    %v331 = vunpack.c.h.b16 %v120
    %v332 = vunpack.c.l.b16 %v121
    %v333 = vunpack.c.h.b16 %v121
    %v334 = vunpack.c.l.b16 %v122
    %v335 = vunpack.c.h.b16 %v122
    %v336 = vunpack.c.l.b16 %v123
    %v337 = vunpack.c.h.b16 %v123
    %v338 = vunpack.c.l.b16 %v124
    %v339 = vunpack.c.h.b16 %v124
    %v340 = vunpack.c.l.b16 %v125
    %v341 = vunpack.c.h.b16 %v125
    %v342 = vunpack.c.l.b16 %v126
    %v343 = vunpack.c.h.b16 %v126
    %v344 = vunpack.c.l.b16 %v127
    %v345 = vunpack.c.h.b16 %v127
    %v346 = vunpack.c.l.b16 %v128
    %v347 = vunpack.c.h.b16 %v128
    %v348 = vunpack.c.l.b16 %v129
    %v349 = vunpack.c.h.b16 %v129
    %v350 = vunpack.c.l.b16 %v130
    %v351 = vunpack.c.h.b16 %v130
    %v352 = vunpack.c.l.b16 %v131
    %v353 = vunpack.c.h.b16 %v131
    %v354 = vunpack.c.l.b16 %v132
    %v355 = vunpack.c.h.b16 %v132
    %v356 = vunpack.c.l.b16 %v133
    %v357 = vunpack.c.h.b16 %v133
    %v358 = vpack.c.b16 %v234, %v230
    %v359 = vpack.c.b16 %v235, %v231
    %v360 = vpack.c.b16 %v236, %v232
    %v361 = vpack.c.b16 %v237, %v233
    %v362 = vpack.c.b16 %v242, %v238
    %v363 = vpack.c.b16 %v243, %v239
    %v364 = vpack.c.b16 %v244, %v240
    %v365 = vpack.c.b16 %v245, %v241
    %v366 = vpack.c.b16 %v250, %v246
    %v367 = vpack.c.b16 %v251, %v247
    %v368 = vpack.c.b16 %v252, %v248
    %v369 = vpack.c.b16 %v253, %v249
    %v370 = vpack.c.b16 %v258, %v254
    %v371 = vpack.c.b16 %v259, %v255
    %v372 = vpack.c.b16 %v260, %v256
    %v373 = vpack.c.b16 %v261, %v257
    %v374 = vpack.c.b16 %v266, %v262
    %v375 = vpack.c.b16 %v267, %v263
    %v376 = vpack.c.b16 %v268, %v264
    %v377 = vpack.c.b16 %v269, %v265
    %v378 = vpack.c.b16 %v274, %v270
    %v379 = vpack.c.b16 %v275, %v271
    %v380 = vpack.c.b16 %v276, %v272
    %v381 = vpack.c.b16 %v277, %v273
    %v382 = vpack.c.b16 %v282, %v278
    %v383 = vpack.c.b16 %v283, %v279
    %v384 = vpack.c.b16 %v284, %v280
    %v385 = vpack.c.b16 %v285, %v281
    %v386 = vpack.c.b16 %v290, %v286
    %v387 = vpack.c.b16 %v291, %v287
    %v388 = vpack.c.b16 %v292, %v288
    %v389 = vpack.c.b16 %v293, %v289
    %v390 = vpack.c.b16 %v298, %v294
    %v391 = vpack.c.b16 %v299, %v295
    %v392 = vpack.c.b16 %v300, %v296
    %v393 = vpack.c.b16 %v301, %v297
    %v394 = vpack.c.b16 %v306, %v302
    %v395 = vpack.c.b16 %v307, %v303
    %v396 = vpack.c.b16 %v308, %v304
    %v397 = vpack.c.b16 %v309, %v305
    %v398 = vpack.c.b16 %v314, %v310
    %v399 = vpack.c.b16 %v315, %v311
    %v400 = vpack.c.b16 %v316, %v312
    %v401 = vpack.c.b16 %v317, %v313
    %v402 = vpack.c.b16 %v322, %v318
    %v403 = vpack.c.b16 %v323, %v319
    %v404 = vpack.c.b16 %v324, %v320
    %v405 = vpack.c.b16 %v325, %v321
    %v406 = vpack.c.b16 %v330, %v326
    %v407 = vpack.c.b16 %v331, %v327
    %v408 = vpack.c.b16 %v332, %v328
    %v409 = vpack.c.b16 %v333, %v329
    %v410 = vpack.c.b16 %v338, %v334
    %v411 = vpack.c.b16 %v339, %v335
    %v412 = vpack.c.b16 %v340, %v336
    %v413 = vpack.c.b16 %v341, %v337
    %v414 = vpack.c.b16 %v346, %v342
    %v415 = vpack.c.b16 %v347, %v343
    %v416 = vpack.c.b16 %v348, %v344
    %v417 = vpack.c.b16 %v349, %v345
    %v418 = vpack.c.b16 %v354, %v350
    %v419 = vpack.c.b16 %v355, %v351
    %v420 = vpack.c.b16 %v356, %v352
    %v421 = vpack.c.b16 %v357, %v353
    %486 = vmatprep.subr.bf16.mxu0 %v359
    %487 = vmatpush1.bf16.msra.mxu0 %v358
    %488 = vmatprep.subr.bf16.mxu0 %v363
    %489 = vmatpush1.bf16.msra.mxu0 %v362
    %490 = vmatprep.subr.bf16.mxu0 %v367
    %491 = vmatpush1.bf16.msra.mxu0 %v366
    %492 = vmatprep.subr.bf16.mxu0 %v371
    %493 = vmatpush1.bf16.msra.mxu0 %v370
    %494 = vmatprep.subr.bf16.mxu0 %v375
    %495 = vmatpush1.bf16.msra.mxu0 %v374
    %496 = vmatprep.subr.bf16.mxu0 %v379
    %497 = vmatpush1.bf16.msra.mxu0 %v378
    %498 = vmatprep.subr.bf16.mxu0 %v383
    %499 = vmatpush1.bf16.msra.mxu0 %v382
    %500 = vmatprep.subr.bf16.mxu0 %v387
    %501 = vmatpush1.bf16.msra.mxu0 %v386
    %502 = vmatprep.subr.bf16.mxu0 %v391
    %503 = vmatpush1.bf16.msra.mxu0 %v390
    %504 = vmatprep.subr.bf16.mxu0 %v395
    %505 = vmatpush1.bf16.msra.mxu0 %v394
    %506 = vmatprep.subr.bf16.mxu0 %v399
    %507 = vmatpush1.bf16.msra.mxu0 %v398
    %508 = vmatprep.subr.bf16.mxu0 %v403
    %509 = vmatpush1.bf16.msra.mxu0 %v402
    %510 = vmatprep.subr.bf16.mxu0 %v407
    %511 = vmatpush1.bf16.msra.mxu0 %v406
    %512 = vmatprep.subr.bf16.mxu0 %v411
    %513 = vmatpush1.bf16.msra.mxu0 %v410
    %514 = vmatprep.subr.bf16.mxu0 %v415
    %515 = vmatpush1.bf16.msra.mxu0 %v414
    %516 = vmatprep.subr.bf16.mxu0 %v419
    %517 = vmatpush1.bf16.msra.mxu0 %v418
    %518 = vmatprep.mubr.bf16.mxu0 %v163
    %519 = vmatmul.mubr.bf16.gmra.mrb[0].mxu0 %v162
    %v520 = vpop.f32.mrb[0].mxu0
    %v521 = vadd.f32 %v139, %v520
    %v522 = vpop.f32.mrb[0].mxu0
    %v523 = vadd.f32 %v143, %v522
    %v524 = vpop.f32.mrb[0].mxu0
    %v525 = vadd.f32 %v139, %v524
    %v526 = vpop.f32.mrb[0].mxu0
    %v527 = vadd.f32 %v143, %v526
    %528 = vdwg.mxu0
    %529 = vmatprep.subr.bf16.mxu0 %v361
    %530 = vmatpush1.bf16.msra.mxu0 %v360
    %531 = vmatprep.subr.bf16.mxu0 %v365
    %532 = vmatpush1.bf16.msra.mxu0 %v364
    %533 = vmatprep.subr.bf16.mxu0 %v369
    %534 = vmatpush1.bf16.msra.mxu0 %v368
    %535 = vmatprep.subr.bf16.mxu0 %v373
    %536 = vmatpush1.bf16.msra.mxu0 %v372
    %537 = vmatprep.subr.bf16.mxu0 %v377
    %538 = vmatpush1.bf16.msra.mxu0 %v376
    %539 = vmatprep.subr.bf16.mxu0 %v381
    %540 = vmatpush1.bf16.msra.mxu0 %v380
    %541 = vmatprep.subr.bf16.mxu0 %v385
    %542 = vmatpush1.bf16.msra.mxu0 %v384
    %543 = vmatprep.subr.bf16.mxu0 %v389
    %544 = vmatpush1.bf16.msra.mxu0 %v388
    %545 = vmatprep.subr.bf16.mxu0 %v393
    %546 = vmatpush1.bf16.msra.mxu0 %v392
    %547 = vmatprep.subr.bf16.mxu0 %v397
    %548 = vmatpush1.bf16.msra.mxu0 %v396
    %549 = vmatprep.subr.bf16.mxu0 %v401
    %550 = vmatpush1.bf16.msra.mxu0 %v400
    %551 = vmatprep.subr.bf16.mxu0 %v405
    %552 = vmatpush1.bf16.msra.mxu0 %v404
    %553 = vmatprep.subr.bf16.mxu0 %v409
    %554 = vmatpush1.bf16.msra.mxu0 %v408
    %555 = vmatprep.subr.bf16.mxu0 %v413
    %556 = vmatpush1.bf16.msra.mxu0 %v412
    %557 = vmatprep.subr.bf16.mxu0 %v417
    %558 = vmatpush1.bf16.msra.mxu0 %v416
    %559 = vmatprep.subr.bf16.mxu0 %v421
    %560 = vmatpush1.bf16.msra.mxu0 %v420
    %561 = vmatprep.mubr.bf16.mxu0 %v163
    %562 = vmatmul.mubr.bf16.gmra.mrb[0].mxu0 %v162
    %v563 = vpop.f32.mrb[0].mxu0
    %v564 = vadd.f32 %v147, %v563
    %v565 = vpop.f32.mrb[0].mxu0
    %v566 = vadd.f32 %v151, %v565
    %v567 = vpop.f32.mrb[0].mxu0
    %v568 = vadd.f32 %v147, %v567
    %v569 = vpop.f32.mrb[0].mxu0
    %v570 = vadd.f32 %v151, %v569
    %571 = vdwg.mxu0
    %v572 = vxor.u32 %v521, 2147483648
    %v573 = vxor.u32 %v523, 2147483648
    %v574 = vxor.u32 %v564, 2147483648
    %v575 = vxor.u32 %v566, 2147483648
    %v576 = vxor.u32 %v525, 2147483648
    %v577 = vxor.u32 %v527, 2147483648
    %v578 = vxor.u32 %v568, 2147483648
    %v579 = vxor.u32 %v570, 2147483648
    %v580 = vmul.f32 %v572, 1.442695
    %v581 = vpow.pop %v580
    %v582 = vmul.f32 %v573, 1.442695
    %v583 = vpow.pop %v582
    %v584 = vmul.f32 %v574, 1.442695
    %v585 = vpow.pop %v584
    %v586 = vmul.f32 %v575, 1.442695
    %v587 = vpow.pop %v586
    %v588 = vmul.f32 %v576, 1.442695
    %v589 = vpow.pop %v588
    %v590 = vmul.f32 %v577, 1.442695
    %v591 = vpow.pop %v590
    %v592 = vmul.f32 %v578, 1.442695
    %v593 = vpow.pop %v592
    %v594 = vmul.f32 %v579, 1.442695
    %v595 = vpow.pop %v594
    %v596 = vadd.f32 %v581, 1.0
    %v597 = vadd.f32 %v583, 1.0
    %v598 = vadd.f32 %v585, 1.0
    %v599 = vadd.f32 %v587, 1.0
    %v600 = vadd.f32 %v589, 1.0
    %v601 = vadd.f32 %v591, 1.0
    %v602 = vadd.f32 %v593, 1.0
    %v603 = vadd.f32 %v595, 1.0
    %v604 = vrcp.pop %v596
    %v605 = vmul.f32 1.0, %v604
    %v606 = vrcp.pop %v597
    %v607 = vmul.f32 1.0, %v606
    %v608 = vrcp.pop %v598
    %v609 = vmul.f32 1.0, %v608
    %v610 = vrcp.pop %v599
    %v611 = vmul.f32 1.0, %v610
    %v612 = vrcp.pop %v600
    %v613 = vmul.f32 1.0, %v612
    %v614 = vrcp.pop %v601
    %v615 = vmul.f32 1.0, %v614
    %v616 = vrcp.pop %v602
    %v617 = vmul.f32 1.0, %v616
    %v618 = vrcp.pop %v603
    %v619 = vmul.f32 1.0, %v618
    %v620 = vmul.f32 %v521, %v605
    %v621 = vmul.f32 %v523, %v607
    %v622 = vmul.f32 %v564, %v609
    %v623 = vmul.f32 %v566, %v611
    %v624 = vmul.f32 %v525, %v613
    %v625 = vmul.f32 %v527, %v615
    %v626 = vmul.f32 %v568, %v617
    %v627 = vmul.f32 %v570, %v619
    %v628 = vpack.c.bf16 %v624, %v620
    %v629 = vpack.c.bf16 %v625, %v621
    %v630 = vpack.c.bf16 %v626, %v622
    %v631 = vpack.c.bf16 %v627, %v623
    %v632 = vld [vmem:[#allocation4] sm:$0xff]
    %v633 = vld [vmem:[#allocation4 + $0x8] sm:$0xff]
    %v634 = vld [vmem:[#allocation4 + $0x10] sm:$0xff]
    %v635 = vld [vmem:[#allocation4 + $0x18] sm:$0xff]
    %v636 = vld [vmem:[#allocation4 + $0x20] sm:$0xff]
    %v637 = vld [vmem:[#allocation4 + $0x28] sm:$0xff]
    %v638 = vld [vmem:[#allocation4 + $0x30] sm:$0xff]
    %v639 = vld [vmem:[#allocation4 + $0x38] sm:$0xff]
    %v640 = vld [vmem:[#allocation4 + $0x40] sm:$0xff]
    %v641 = vld [vmem:[#allocation4 + $0x48] sm:$0xff]
    %v642 = vld [vmem:[#allocation4 + $0x50] sm:$0xff]
    %v643 = vld [vmem:[#allocation4 + $0x58] sm:$0xff]
    %v644 = vld [vmem:[#allocation4 + $0x60] sm:$0xff]
    %v645 = vld [vmem:[#allocation4 + $0x68] sm:$0xff]
    %v646 = vld [vmem:[#allocation4 + $0x70] sm:$0xff]
    %v647 = vld [vmem:[#allocation4 + $0x78] sm:$0xff]
    %v648 = vld [vmem:[#allocation4 + $0x80] sm:$0xff]
    %v649 = vld [vmem:[#allocation4 + $0x88] sm:$0xff]
    %v650 = vld [vmem:[#allocation4 + $0x90] sm:$0xff]
    %v651 = vld [vmem:[#allocation4 + $0x98] sm:$0xff]
    %v652 = vld [vmem:[#allocation4 + $0xa0] sm:$0xff]
    %v653 = vld [vmem:[#allocation4 + $0xa8] sm:$0xff]
    %v654 = vld [vmem:[#allocation4 + $0xb0] sm:$0xff]
    %v655 = vld [vmem:[#allocation4 + $0xb8] sm:$0xff]
    %v656 = vld [vmem:[#allocation4 + $0xc0] sm:$0xff]
    %v657 = vld [vmem:[#allocation4 + $0xc8] sm:$0xff]
    %v658 = vld [vmem:[#allocation4 + $0xd0] sm:$0xff]
    %v659 = vld [vmem:[#allocation4 + $0xd8] sm:$0xff]
    %v660 = vld [vmem:[#allocation4 + $0xe0] sm:$0xff]
    %v661 = vld [vmem:[#allocation4 + $0xe8] sm:$0xff]
    %v662 = vld [vmem:[#allocation4 + $0xf0] sm:$0xff]
    %v663 = vld [vmem:[#allocation4 + $0xf8] sm:$0xff]
    %v664 = vld [vmem:[#allocation4 + $0x100] sm:$0xff]
    %v665 = vld [vmem:[#allocation4 + $0x108] sm:$0xff]
    %v666 = vld [vmem:[#allocation4 + $0x110] sm:$0xff]
    %v667 = vld [vmem:[#allocation4 + $0x118] sm:$0xff]
    %v668 = vld [vmem:[#allocation4 + $0x120] sm:$0xff]
    %v669 = vld [vmem:[#allocation4 + $0x128] sm:$0xff]
    %v670 = vld [vmem:[#allocation4 + $0x130] sm:$0xff]
    %v671 = vld [vmem:[#allocation4 + $0x138] sm:$0xff]
    %v672 = vld [vmem:[#allocation4 + $0x140] sm:$0xff]
    %v673 = vld [vmem:[#allocation4 + $0x148] sm:$0xff]
    %v674 = vld [vmem:[#allocation4 + $0x150] sm:$0xff]
    %v675 = vld [vmem:[#allocation4 + $0x158] sm:$0xff]
    %v676 = vld [vmem:[#allocation4 + $0x160] sm:$0xff]
    %v677 = vld [vmem:[#allocation4 + $0x168] sm:$0xff]
    %v678 = vld [vmem:[#allocation4 + $0x170] sm:$0xff]
    %v679 = vld [vmem:[#allocation4 + $0x178] sm:$0xff]
    %v680 = vld [vmem:[#allocation4 + $0x180] sm:$0xff]
    %v681 = vld [vmem:[#allocation4 + $0x188] sm:$0xff]
    %v682 = vld [vmem:[#allocation4 + $0x190] sm:$0xff]
    %v683 = vld [vmem:[#allocation4 + $0x198] sm:$0xff]
    %v684 = vld [vmem:[#allocation4 + $0x1a0] sm:$0xff]
    %v685 = vld [vmem:[#allocation4 + $0x1a8] sm:$0xff]
    %v686 = vld [vmem:[#allocation4 + $0x1b0] sm:$0xff]
    %v687 = vld [vmem:[#allocation4 + $0x1b8] sm:$0xff]
    %v688 = vld [vmem:[#allocation4 + $0x1c0] sm:$0xff]
    %v689 = vld [vmem:[#allocation4 + $0x1c8] sm:$0xff]
    %v690 = vld [vmem:[#allocation4 + $0x1d0] sm:$0xff]
    %v691 = vld [vmem:[#allocation4 + $0x1d8] sm:$0xff]
    %v692 = vld [vmem:[#allocation4 + $0x1e0] sm:$0xff]
    %v693 = vld [vmem:[#allocation4 + $0x1e8] sm:$0xff]
    %v694 = vld [vmem:[#allocation4 + $0x1f0] sm:$0xff]
    %v695 = vld [vmem:[#allocation4 + $0x1f8] sm:$0xff]
    %v696 = vld [vmem:[%s4] sm:$0x3]
    %v698 = vlaneseq
    %v699 = vshrl.u32 %v698, 7
    %v700 = vsub.s32 0, %v699
    %v701 = vrot.slane %v696, %v700
    %v702 = vlaneseq
    %v703 = vshrl.u32 %v702, 7
    %v704 = vsub.s32 1, %v703
    %v705 = vrot.slane %v696, %v704
    %v772 = vunpack.c.l.b16 %v632
    %v773 = vunpack.c.h.b16 %v632
    %v774 = vunpack.c.l.b16 %v633
    %v775 = vunpack.c.h.b16 %v633
    %v776 = vunpack.c.l.b16 %v634
    %v777 = vunpack.c.h.b16 %v634
    %v778 = vunpack.c.l.b16 %v635
    %v779 = vunpack.c.h.b16 %v635
    %v780 = vunpack.c.l.b16 %v636
    %v781 = vunpack.c.h.b16 %v636
    %v782 = vunpack.c.l.b16 %v637
    %v783 = vunpack.c.h.b16 %v637
    %v784 = vunpack.c.l.b16 %v638
    %v785 = vunpack.c.h.b16 %v638
    %v786 = vunpack.c.l.b16 %v639
    %v787 = vunpack.c.h.b16 %v639
    %v788 = vunpack.c.l.b16 %v640
    %v789 = vunpack.c.h.b16 %v640
    %v790 = vunpack.c.l.b16 %v641
    %v791 = vunpack.c.h.b16 %v641
    %v792 = vunpack.c.l.b16 %v642
    %v793 = vunpack.c.h.b16 %v642
    %v794 = vunpack.c.l.b16 %v643
    %v795 = vunpack.c.h.b16 %v643
    %v796 = vunpack.c.l.b16 %v644
    %v797 = vunpack.c.h.b16 %v644
    %v798 = vunpack.c.l.b16 %v645
    %v799 = vunpack.c.h.b16 %v645
    %v800 = vunpack.c.l.b16 %v646
    %v801 = vunpack.c.h.b16 %v646
    %v802 = vunpack.c.l.b16 %v647
    %v803 = vunpack.c.h.b16 %v647
    %v804 = vunpack.c.l.b16 %v648
    %v805 = vunpack.c.h.b16 %v648
    %v806 = vunpack.c.l.b16 %v649
    %v807 = vunpack.c.h.b16 %v649
    %v808 = vunpack.c.l.b16 %v650
    %v809 = vunpack.c.h.b16 %v650
    %v810 = vunpack.c.l.b16 %v651
    %v811 = vunpack.c.h.b16 %v651
    %v812 = vunpack.c.l.b16 %v652
    %v813 = vunpack.c.h.b16 %v652
    %v814 = vunpack.c.l.b16 %v653
    %v815 = vunpack.c.h.b16 %v653
    %v816 = vunpack.c.l.b16 %v654
    %v817 = vunpack.c.h.b16 %v654
    %v818 = vunpack.c.l.b16 %v655
    %v819 = vunpack.c.h.b16 %v655
    %v820 = vunpack.c.l.b16 %v656
    %v821 = vunpack.c.h.b16 %v656
    %v822 = vunpack.c.l.b16 %v657
    %v823 = vunpack.c.h.b16 %v657
    %v824 = vunpack.c.l.b16 %v658
    %v825 = vunpack.c.h.b16 %v658
    %v826 = vunpack.c.l.b16 %v659
    %v827 = vunpack.c.h.b16 %v659
    %v828 = vunpack.c.l.b16 %v660
    %v829 = vunpack.c.h.b16 %v660
    %v830 = vunpack.c.l.b16 %v661
    %v831 = vunpack.c.h.b16 %v661
    %v832 = vunpack.c.l.b16 %v662
    %v833 = vunpack.c.h.b16 %v662
    %v834 = vunpack.c.l.b16 %v663
    %v835 = vunpack.c.h.b16 %v663
    %v836 = vunpack.c.l.b16 %v664
    %v837 = vunpack.c.h.b16 %v664
    %v838 = vunpack.c.l.b16 %v665
    %v839 = vunpack.c.h.b16 %v665
    %v840 = vunpack.c.l.b16 %v666
    %v841 = vunpack.c.h.b16 %v666
    %v842 = vunpack.c.l.b16 %v667
    %v843 = vunpack.c.h.b16 %v667
    %v844 = vunpack.c.l.b16 %v668
    %v845 = vunpack.c.h.b16 %v668
    %v846 = vunpack.c.l.b16 %v669
    %v847 = vunpack.c.h.b16 %v669
    %v848 = vunpack.c.l.b16 %v670
    %v849 = vunpack.c.h.b16 %v670
    %v850 = vunpack.c.l.b16 %v671
    %v851 = vunpack.c.h.b16 %v671
    %v852 = vunpack.c.l.b16 %v672
    %v853 = vunpack.c.h.b16 %v672
    %v854 = vunpack.c.l.b16 %v673
    %v855 = vunpack.c.h.b16 %v673
    %v856 = vunpack.c.l.b16 %v674
    %v857 = vunpack.c.h.b16 %v674
    %v858 = vunpack.c.l.b16 %v675
    %v859 = vunpack.c.h.b16 %v675
    %v860 = vunpack.c.l.b16 %v676
    %v861 = vunpack.c.h.b16 %v676
    %v862 = vunpack.c.l.b16 %v677
    %v863 = vunpack.c.h.b16 %v677
    %v864 = vunpack.c.l.b16 %v678
    %v865 = vunpack.c.h.b16 %v678
    %v866 = vunpack.c.l.b16 %v679
    %v867 = vunpack.c.h.b16 %v679
    %v868 = vunpack.c.l.b16 %v680
    %v869 = vunpack.c.h.b16 %v680
    %v870 = vunpack.c.l.b16 %v681
    %v871 = vunpack.c.h.b16 %v681
    %v872 = vunpack.c.l.b16 %v682
    %v873 = vunpack.c.h.b16 %v682
    %v874 = vunpack.c.l.b16 %v683
    %v875 = vunpack.c.h.b16 %v683
    %v876 = vunpack.c.l.b16 %v684
    %v877 = vunpack.c.h.b16 %v684
    %v878 = vunpack.c.l.b16 %v685
    %v879 = vunpack.c.h.b16 %v685
    %v880 = vunpack.c.l.b16 %v686
    %v881 = vunpack.c.h.b16 %v686
    %v882 = vunpack.c.l.b16 %v687
    %v883 = vunpack.c.h.b16 %v687
    %v884 = vunpack.c.l.b16 %v688
    %v885 = vunpack.c.h.b16 %v688
    %v886 = vunpack.c.l.b16 %v689
    %v887 = vunpack.c.h.b16 %v689
    %v888 = vunpack.c.l.b16 %v690
    %v889 = vunpack.c.h.b16 %v690
    %v890 = vunpack.c.l.b16 %v691
    %v891 = vunpack.c.h.b16 %v691
    %v892 = vunpack.c.l.b16 %v692
    %v893 = vunpack.c.h.b16 %v692
    %v894 = vunpack.c.l.b16 %v693
    %v895 = vunpack.c.h.b16 %v693
    %v896 = vunpack.c.l.b16 %v694
    %v897 = vunpack.c.h.b16 %v694
    %v898 = vunpack.c.l.b16 %v695
    %v899 = vunpack.c.h.b16 %v695
    %v900 = vpack.c.b16 %v774, %v772
    %v901 = vpack.c.b16 %v775, %v773
    %v902 = vpack.c.b16 %v778, %v776
    %v903 = vpack.c.b16 %v779, %v777
    %v904 = vpack.c.b16 %v782, %v780
    %v905 = vpack.c.b16 %v783, %v781
    %v906 = vpack.c.b16 %v786, %v784
    %v907 = vpack.c.b16 %v787, %v785
    %v908 = vpack.c.b16 %v790, %v788
    %v909 = vpack.c.b16 %v791, %v789
    %v910 = vpack.c.b16 %v794, %v792
    %v911 = vpack.c.b16 %v795, %v793
    %v912 = vpack.c.b16 %v798, %v796
    %v913 = vpack.c.b16 %v799, %v797
    %v914 = vpack.c.b16 %v802, %v800
    %v915 = vpack.c.b16 %v803, %v801
    %v916 = vpack.c.b16 %v806, %v804
    %v917 = vpack.c.b16 %v807, %v805
    %v918 = vpack.c.b16 %v810, %v808
    %v919 = vpack.c.b16 %v811, %v809
    %v920 = vpack.c.b16 %v814, %v812
    %v921 = vpack.c.b16 %v815, %v813
    %v922 = vpack.c.b16 %v818, %v816
    %v923 = vpack.c.b16 %v819, %v817
    %v924 = vpack.c.b16 %v822, %v820
    %v925 = vpack.c.b16 %v823, %v821
    %v926 = vpack.c.b16 %v826, %v824
    %v927 = vpack.c.b16 %v827, %v825
    %v928 = vpack.c.b16 %v830, %v828
    %v929 = vpack.c.b16 %v831, %v829
    %v930 = vpack.c.b16 %v834, %v832
    %v931 = vpack.c.b16 %v835, %v833
    %v932 = vpack.c.b16 %v838, %v836
    %v933 = vpack.c.b16 %v839, %v837
    %v934 = vpack.c.b16 %v842, %v840
    %v935 = vpack.c.b16 %v843, %v841
    %v936 = vpack.c.b16 %v846, %v844
    %v937 = vpack.c.b16 %v847, %v845
    %v938 = vpack.c.b16 %v850, %v848
    %v939 = vpack.c.b16 %v851, %v849
    %v940 = vpack.c.b16 %v854, %v852
    %v941 = vpack.c.b16 %v855, %v853
    %v942 = vpack.c.b16 %v858, %v856
    %v943 = vpack.c.b16 %v859, %v857
    %v944 = vpack.c.b16 %v862, %v860
    %v945 = vpack.c.b16 %v863, %v861
    %v946 = vpack.c.b16 %v866, %v864
    %v947 = vpack.c.b16 %v867, %v865
    %v948 = vpack.c.b16 %v870, %v868
    %v949 = vpack.c.b16 %v871, %v869
    %v950 = vpack.c.b16 %v874, %v872
    %v951 = vpack.c.b16 %v875, %v873
    %v952 = vpack.c.b16 %v878, %v876
    %v953 = vpack.c.b16 %v879, %v877
    %v954 = vpack.c.b16 %v882, %v880
    %v955 = vpack.c.b16 %v883, %v881
    %v956 = vpack.c.b16 %v886, %v884
    %v957 = vpack.c.b16 %v887, %v885
    %v958 = vpack.c.b16 %v890, %v888
    %v959 = vpack.c.b16 %v891, %v889
    %v960 = vpack.c.b16 %v894, %v892
    %v961 = vpack.c.b16 %v895, %v893
    %v962 = vpack.c.b16 %v898, %v896
    %v963 = vpack.c.b16 %v899, %v897
    %1028 = vmatprep.subr.bf16.mxu0 %v901
    %1029 = vmatpush1.bf16.msra.mxu0 %v900
    %1030 = vmatprep.subr.bf16.mxu0 %v903
    %1031 = vmatpush1.bf16.msra.mxu0 %v902
    %1032 = vmatprep.subr.bf16.mxu0 %v905
    %1033 = vmatpush1.bf16.msra.mxu0 %v904
    %1034 = vmatprep.subr.bf16.mxu0 %v907
    %1035 = vmatpush1.bf16.msra.mxu0 %v906
    %1036 = vmatprep.subr.bf16.mxu0 %v909
    %1037 = vmatpush1.bf16.msra.mxu0 %v908
    %1038 = vmatprep.subr.bf16.mxu0 %v911
    %1039 = vmatpush1.bf16.msra.mxu0 %v910
    %1040 = vmatprep.subr.bf16.mxu0 %v913
    %1041 = vmatpush1.bf16.msra.mxu0 %v912
    %1042 = vmatprep.subr.bf16.mxu0 %v915
    %1043 = vmatpush1.bf16.msra.mxu0 %v914
    %1044 = vmatprep.subr.bf16.mxu0 %v917
    %1045 = vmatpush1.bf16.msra.mxu0 %v916
    %1046 = vmatprep.subr.bf16.mxu0 %v919
    %1047 = vmatpush1.bf16.msra.mxu0 %v918
    %1048 = vmatprep.subr.bf16.mxu0 %v921
    %1049 = vmatpush1.bf16.msra.mxu0 %v920
    %1050 = vmatprep.subr.bf16.mxu0 %v923
    %1051 = vmatpush1.bf16.msra.mxu0 %v922
    %1052 = vmatprep.subr.bf16.mxu0 %v925
    %1053 = vmatpush1.bf16.msra.mxu0 %v924
    %1054 = vmatprep.subr.bf16.mxu0 %v927
    %1055 = vmatpush1.bf16.msra.mxu0 %v926
    %1056 = vmatprep.subr.bf16.mxu0 %v929
    %1057 = vmatpush1.bf16.msra.mxu0 %v928
    %1058 = vmatprep.subr.bf16.mxu0 %v931
    %1059 = vmatpush1.bf16.msra.mxu0 %v930
    %1060 = vmatprep.mubr.bf16.mxu0 %v629
    %1061 = vmatmul.mubr.bf16.gmra.mrb[0].mxu0 %v628
    %v1062 = vpop.f32.mrb[0].mxu0
    %v1063 = vadd.f32 %v701, %v1062
    %v1064 = vpop.f32.mrb[0].mxu0
    %v1065 = vadd.f32 %v705, %v1064
    %v1066 = vpop.f32.mrb[0].mxu0
    %v1067 = vadd.f32 %v701, %v1066
    %v1068 = vpop.f32.mrb[0].mxu0
    %v1069 = vadd.f32 %v705, %v1068
    %1070 = vdwg.mxu0
    %1071 = vmatprep.subr.bf16.mxu0 %v933
    %1072 = vmatpush1.bf16.msra.mxu0 %v932
    %1073 = vmatprep.subr.bf16.mxu0 %v935
    %1074 = vmatpush1.bf16.msra.mxu0 %v934
    %1075 = vmatprep.subr.bf16.mxu0 %v937
    %1076 = vmatpush1.bf16.msra.mxu0 %v936
    %1077 = vmatprep.subr.bf16.mxu0 %v939
    %1078 = vmatpush1.bf16.msra.mxu0 %v938
    %1079 = vmatprep.subr.bf16.mxu0 %v941
    %1080 = vmatpush1.bf16.msra.mxu0 %v940
    %1081 = vmatprep.subr.bf16.mxu0 %v943
    %1082 = vmatpush1.bf16.msra.mxu0 %v942
    %1083 = vmatprep.subr.bf16.mxu0 %v945
    %1084 = vmatpush1.bf16.msra.mxu0 %v944
    %1085 = vmatprep.subr.bf16.mxu0 %v947
    %1086 = vmatpush1.bf16.msra.mxu0 %v946
    %1087 = vmatprep.subr.bf16.mxu0 %v949
    %1088 = vmatpush1.bf16.msra.mxu0 %v948
    %1089 = vmatprep.subr.bf16.mxu0 %v951
    %1090 = vmatpush1.bf16.msra.mxu0 %v950
    %1091 = vmatprep.subr.bf16.mxu0 %v953
    %1092 = vmatpush1.bf16.msra.mxu0 %v952
    %1093 = vmatprep.subr.bf16.mxu0 %v955
    %1094 = vmatpush1.bf16.msra.mxu0 %v954
    %1095 = vmatprep.subr.bf16.mxu0 %v957
    %1096 = vmatpush1.bf16.msra.mxu0 %v956
    %1097 = vmatprep.subr.bf16.mxu0 %v959
    %1098 = vmatpush1.bf16.msra.mxu0 %v958
    %1099 = vmatprep.subr.bf16.mxu0 %v961
    %1100 = vmatpush1.bf16.msra.mxu0 %v960
    %1101 = vmatprep.subr.bf16.mxu0 %v963
    %1102 = vmatpush1.bf16.msra.mxu0 %v962
    %1103 = vmatprep.mubr.bf16.mxu0 %v631
    %1104 = vmatmul.mubr.bf16.gmra.mrb[0].mxu0 %v630
    %v1105 = vpop.f32.mrb[0].mxu0
    %v1106 = vadd.f32 %v1063, %v1105
    %v1107 = vpop.f32.mrb[0].mxu0
    %v1108 = vadd.f32 %v1065, %v1107
    %v1109 = vpop.f32.mrb[0].mxu0
    %v1110 = vadd.f32 %v1067, %v1109
    %v1111 = vpop.f32.mrb[0].mxu0
    %v1112 = vadd.f32 %v1069, %v1111
    %1113 = vdwg.mxu0
    %v1114 = vxor.u32 %v1106, 2147483648
    %v1115 = vxor.u32 %v1108, 2147483648
    %v1116 = vxor.u32 %v1110, 2147483648
    %v1117 = vxor.u32 %v1112, 2147483648
    %v1118 = vmul.f32 %v1114, 1.442695
    %v1119 = vpow.pop %v1118
    %v1120 = vmul.f32 %v1115, 1.442695
    %v1121 = vpow.pop %v1120
    %v1122 = vmul.f32 %v1116, 1.442695
    %v1123 = vpow.pop %v1122
    %v1124 = vmul.f32 %v1117, 1.442695
    %v1125 = vpow.pop %v1124
    %v1126 = vadd.f32 %v1119, 1.0
    %v1127 = vadd.f32 %v1121, 1.0
    %v1128 = vadd.f32 %v1123, 1.0
    %v1129 = vadd.f32 %v1125, 1.0
    %v1130 = vrcp.pop %v1126
    %v1131 = vmul.f32 1.0, %v1130
    %v1132 = vrcp.pop %v1127
    %v1133 = vmul.f32 1.0, %v1132
    %v1134 = vrcp.pop %v1128
    %v1135 = vmul.f32 1.0, %v1134
    %v1136 = vrcp.pop %v1129
    %v1137 = vmul.f32 1.0, %v1136
    %v1138 = vmul.f32 %v1106, %v1131
    %v1139 = vmul.f32 %v1108, %v1133
    %v1140 = vmul.f32 %v1110, %v1135
    %v1141 = vmul.f32 %v1112, %v1137
    %v1142 = vpack.c.bf16 %v1140, %v1138
    %v1143 = vpack.c.bf16 %v1141, %v1139
    %v1144 = vld [vmem:[#allocation6] sm:$0xf]
    %v1145 = vld [vmem:[#allocation6 + $0x4] sm:$0xf]
    %v1146 = vld [vmem:[#allocation6 + $0x8] sm:$0xf]
    %v1147 = vld [vmem:[#allocation6 + $0xc] sm:$0xf]
    %v1148 = vld [vmem:[#allocation6 + $0x10] sm:$0xf]
    %v1149 = vld [vmem:[#allocation6 + $0x14] sm:$0xf]
    %v1150 = vld [vmem:[#allocation6 + $0x18] sm:$0xf]
    %v1151 = vld [vmem:[#allocation6 + $0x1c] sm:$0xf]
    %v1152 = vld [vmem:[#allocation6 + $0x20] sm:$0xf]
    %v1153 = vld [vmem:[#allocation6 + $0x24] sm:$0xf]
    %v1154 = vld [vmem:[#allocation6 + $0x28] sm:$0xf]
    %v1155 = vld [vmem:[#allocation6 + $0x2c] sm:$0xf]
    %v1156 = vld [vmem:[#allocation6 + $0x30] sm:$0xf]
    %v1157 = vld [vmem:[#allocation6 + $0x34] sm:$0xf]
    %v1158 = vld [vmem:[#allocation6 + $0x38] sm:$0xf]
    %v1159 = vld [vmem:[#allocation6 + $0x3c] sm:$0xf]
    %v1160 = vld [vmem:[#allocation6 + $0x40] sm:$0xf]
    %v1161 = vld [vmem:[#allocation6 + $0x44] sm:$0xf]
    %v1162 = vld [vmem:[#allocation6 + $0x48] sm:$0xf]
    %v1163 = vld [vmem:[#allocation6 + $0x4c] sm:$0xf]
    %v1164 = vld [vmem:[#allocation6 + $0x50] sm:$0xf]
    %v1165 = vld [vmem:[#allocation6 + $0x54] sm:$0xf]
    %v1166 = vld [vmem:[#allocation6 + $0x58] sm:$0xf]
    %v1167 = vld [vmem:[#allocation6 + $0x5c] sm:$0xf]
    %v1168 = vld [vmem:[#allocation6 + $0x60] sm:$0xf]
    %v1169 = vld [vmem:[#allocation6 + $0x64] sm:$0xf]
    %v1170 = vld [vmem:[#allocation6 + $0x68] sm:$0xf]
    %v1171 = vld [vmem:[#allocation6 + $0x6c] sm:$0xf]
    %v1172 = vld [vmem:[#allocation6 + $0x70] sm:$0xf]
    %v1173 = vld [vmem:[#allocation6 + $0x74] sm:$0xf]
    %v1174 = vld [vmem:[#allocation6 + $0x78] sm:$0xf]
    %v1175 = vld [vmem:[#allocation6 + $0x7c] sm:$0xf]
    %v1176 = vld [vmem:[%s6] sm:$0x1]
    %v1178 = vlaneseq
    %v1179 = vshrl.u32 %v1178, 7
    %v1180 = vsub.s32 0, %v1179
    %v1181 = vrot.slane %v1176, %v1180
    %v1215 = vunpack.c.l.b16 %v1144
    %v1216 = vunpack.c.l.b16 %v1145
    %v1217 = vunpack.c.l.b16 %v1146
    %v1218 = vunpack.c.l.b16 %v1147
    %v1219 = vunpack.c.l.b16 %v1148
    %v1220 = vunpack.c.l.b16 %v1149
    %v1221 = vunpack.c.l.b16 %v1150
    %v1222 = vunpack.c.l.b16 %v1151
    %v1223 = vunpack.c.l.b16 %v1152
    %v1224 = vunpack.c.l.b16 %v1153
    %v1225 = vunpack.c.l.b16 %v1154
    %v1226 = vunpack.c.l.b16 %v1155
    %v1227 = vunpack.c.l.b16 %v1156
    %v1228 = vunpack.c.l.b16 %v1157
    %v1229 = vunpack.c.l.b16 %v1158
    %v1230 = vunpack.c.l.b16 %v1159
    %v1231 = vunpack.c.l.b16 %v1160
    %v1232 = vunpack.c.l.b16 %v1161
    %v1233 = vunpack.c.l.b16 %v1162
    %v1234 = vunpack.c.l.b16 %v1163
    %v1235 = vunpack.c.l.b16 %v1164
    %v1236 = vunpack.c.l.b16 %v1165
    %v1237 = vunpack.c.l.b16 %v1166
    %v1238 = vunpack.c.l.b16 %v1167
    %v1239 = vunpack.c.l.b16 %v1168
    %v1240 = vunpack.c.l.b16 %v1169
    %v1241 = vunpack.c.l.b16 %v1170
    %v1242 = vunpack.c.l.b16 %v1171
    %v1243 = vunpack.c.l.b16 %v1172
    %v1244 = vunpack.c.l.b16 %v1173
    %v1245 = vunpack.c.l.b16 %v1174
    %v1246 = vunpack.c.l.b16 %v1175
    %v1247 = vpack.c.b16 %v1216, %v1215
    %v1248 = vpack.c.b16 %v1218, %v1217
    %v1249 = vpack.c.b16 %v1220, %v1219
    %v1250 = vpack.c.b16 %v1222, %v1221
    %v1251 = vpack.c.b16 %v1224, %v1223
    %v1252 = vpack.c.b16 %v1226, %v1225
    %v1253 = vpack.c.b16 %v1228, %v1227
    %v1254 = vpack.c.b16 %v1230, %v1229
    %v1255 = vpack.c.b16 %v1232, %v1231
    %v1256 = vpack.c.b16 %v1234, %v1233
    %v1257 = vpack.c.b16 %v1236, %v1235
    %v1258 = vpack.c.b16 %v1238, %v1237
    %v1259 = vpack.c.b16 %v1240, %v1239
    %v1260 = vpack.c.b16 %v1242, %v1241
    %v1261 = vpack.c.b16 %v1244, %v1243
    %v1262 = vpack.c.b16 %v1246, %v1245
    %1279 = vmatprep.subr.bf16.mxu0 0
    %1280 = vmatpush1.bf16.msra.mxu0 %v1247
    %1281 = vmatprep.subr.bf16.mxu0 0
    %1282 = vmatpush1.bf16.msra.mxu0 %v1248
    %1283 = vmatprep.subr.bf16.mxu0 0
    %1284 = vmatpush1.bf16.msra.mxu0 %v1249
    %1285 = vmatprep.subr.bf16.mxu0 0
    %1286 = vmatpush1.bf16.msra.mxu0 %v1250
    %1287 = vmatprep.subr.bf16.mxu0 0
    %1288 = vmatpush1.bf16.msra.mxu0 %v1251
    %1289 = vmatprep.subr.bf16.mxu0 0
    %1290 = vmatpush1.bf16.msra.mxu0 %v1252
    %1291 = vmatprep.subr.bf16.mxu0 0
    %1292 = vmatpush1.bf16.msra.mxu0 %v1253
    %1293 = vmatprep.subr.bf16.mxu0 0
    %1294 = vmatpush1.bf16.msra.mxu0 %v1254
    %1295 = vmatprep.subr.bf16.mxu0 0
    %1296 = vmatpush1.bf16.msra.mxu0 %v1255
    %1297 = vmatprep.subr.bf16.mxu0 0
    %1298 = vmatpush1.bf16.msra.mxu0 %v1256
    %1299 = vmatprep.subr.bf16.mxu0 0
    %1300 = vmatpush1.bf16.msra.mxu0 %v1257
    %1301 = vmatprep.subr.bf16.mxu0 0
    %1302 = vmatpush1.bf16.msra.mxu0 %v1258
    %1303 = vmatprep.subr.bf16.mxu0 0
    %1304 = vmatpush1.bf16.msra.mxu0 %v1259
    %1305 = vmatprep.subr.bf16.mxu0 0
    %1306 = vmatpush1.bf16.msra.mxu0 %v1260
    %1307 = vmatprep.subr.bf16.mxu0 0
    %1308 = vmatpush1.bf16.msra.mxu0 %v1261
    %1309 = vmatprep.subr.bf16.mxu0 0
    %1310 = vmatpush1.bf16.msra.mxu0 %v1262
    %1311 = vmatprep.mubr.bf16.mxu0 %v1143
    %1312 = vmatmul.mubr.bf16.gmra.mrb[0].mxu0 %v1142
    %v1313 = vpop.f32.mrb[0].mxu0
    %v1314 = vadd.f32 %v1181, %v1313
    %v1315 = vpop.f32.mrb[0].mxu0
    %v1316 = vpop.f32.mrb[0].mxu0
    %v1317 = vadd.f32 %v1181, %v1316
    %v1318 = vpop.f32.mrb[0].mxu0
    %1319 = vdwg.mxu0
    %1320 = vst [vmem:[%s7] sm:$0xff] %v1314
    %1321 = vst [vmem:[%s7 + $0x8] sm:$0xff] %v1317
    // Predicated region
    $region42: #{cassava_fc_head.1} parent=1 // pred_check
      _
    $region43: #{cassava_fc_head.1} parent=1 // pred_check_branch
      %1323 = sbr.rel (0) target = $region45
    $region44: #{cassava_fc_head.1} parent=1 // pred_region
      _
    $region45: #{cassava_fc_head.1} parent=1 // pred_fallthru
      _
    // Predicated region
    $region46: #{cassava_fc_head.1} parent=1 // pred_check
      _
    $region47: #{cassava_fc_head.1} parent=1 // pred_check_branch
      %1325 = sbr.rel (0) target = $region49
    $region48: #{cassava_fc_head.1} parent=1 // pred_region
      _
    $region49: #{cassava_fc_head.1} parent=1 // pred_fallthru
      _
    %1326 = vsyncpa [#allocation3], 1
    %1327 = vsyncpa [#allocation5], 1

</llo_original>
